<compile_context>
chip_gen: v7x
topology: tpu7x:2x2x1
jax: 0.10.0
libtpu: 0.0.40
codegen_flags: <defaults>
</compile_context>

<pallas_src>
import functools

import jax
import jax.numpy as jnp
from jax.experimental import pallas as pl
from jax.experimental.pallas import tpu as pltpu


# ---------------------------------------------------------------------------
# Fast path: single fused kernel, one batch element per grid step.
# ---------------------------------------------------------------------------
def _se_fused_kernel(inv_hw, x_ref, wf_ref, bf_ref, o_ref):
    """Pool -> fused linear -> sigmoid -> scale for one (1, C, HW) block."""
    pooled = jnp.sum(x_ref[...].astype(jnp.float32), axis=-1) * inv_hw      # (1, C)
    e = jnp.dot(pooled, wf_ref[...],
                preferred_element_type=jnp.float32) + bf_ref[...]            # (1, C)
    gate = jax.nn.sigmoid(e)                                                 # (1, C)
    o_ref[...] = (x_ref[...].astype(jnp.float32)
                  * gate[:, :, None]).astype(o_ref.dtype)


# ---------------------------------------------------------------------------
# Fallback path: two-phase tiled design for large C * HW.
# ---------------------------------------------------------------------------
def _pool_gate_kernel(inv_hw, x_ref, wf_ref, bf_ref, gate_ref, acc_ref):
    """Phase 1: accumulate channel sums over HW tiles, then finalize the gate."""
    k = pl.program_id(0)

    @pl.when(k == 0)
    def _():
        acc_ref[...] = jnp.zeros_like(acc_ref)

    # Cross-lane (XLU) reduction of this HW tile, accumulated in f32.
    acc_ref[...] += jnp.sum(x_ref[...].astype(jnp.float32), axis=-1)

    @pl.when(k == pl.num_programs(0) - 1)
    def _():
        pooled = acc_ref[...] * inv_hw                       # (B, C) mean
        e = jnp.dot(pooled, wf_ref[...],
                    preferred_element_type=jnp.float32) + bf_ref[...]
        gate_ref[...] = jax.nn.sigmoid(e)[:, :, None]        # (B, C, 1)


def _scale_kernel(x_ref, gate_ref, o_ref):
    """Phase 2: lane-dense elementwise scale of x by the per-channel gate."""
    o_ref[...] = (x_ref[...].astype(jnp.float32) * gate_ref[...]).astype(o_ref.dtype)


def _choose_hw_tile(hw, c, bytes_per_elem=4, target_tile_bytes=4 * 1024 * 1024):
    """Largest HW tile that (a) is a multiple of 128 dividing HW (or the full
    extent) and (b) keeps a (C, tile) slab near ~4 MiB (safe for v7x VMEM with
    double-buffered input + output)."""
    max_t = max(128, ((target_tile_bytes // max(1, c * bytes_per_elem)) // 128) * 128)
    if hw <= max_t:
        return hw
    for t in range(max_t, 127, -128):
        if hw % t == 0:
            return t
    return hw  # HW not tileable by 128 -> fall back to full-extent block


# ---------------------------------------------------------------------------
# Wrapper
# ---------------------------------------------------------------------------
def se_block(x_nchw, w1, b1, w2, b2, *, force_two_phase=False):
    """SEBlock forward.  x_nchw: (B, C, H, W) float32.
    Linear weights stored transposed vs. PyTorch (y = x @ W + b):
      w1: (C, C//r), b1: (1, C//r), w2: (C//r, C), b2: (1, C)."""
    B, C, H, W = x_nchw.shape
    HW = H * W
    x = x_nchw.reshape(B, C, HW)

    # Fuse the two bias-linears (valid: reference module has no activation
    # between fc1 and fc2).  Tiny; done once in the wrapper.
    w_fused = jnp.dot(w1, w2, preferred_element_type=jnp.float32)        # (C, C)
    b_fused = jnp.dot(b1, w2, preferred_element_type=jnp.float32) + b2   # (1, C)

    itemsize = x.dtype.itemsize
    # Rough per-step VMEM footprint of the fused path: double-buffered input
    # and output (1, C, HW) blocks + the fused weight/bias.
    fused_bytes = 4 * C * HW * itemsize + 2 * C * C * 4 + 2 * C * 4
    use_fused = (not force_two_phase) and fused_bytes <= 16 * 1024 * 1024

    if use_fused:
        # --- Single pass: pool + gate + scale, gridded over batch ---
        out = pl.pallas_call(
            functools.partial(_se_fused_kernel, 1.0 / float(HW)),
            out_shape=jax.ShapeDtypeStruct((B, C, HW), x_nchw.dtype),
            grid_spec=pltpu.PrefetchScalarGridSpec(
                num_scalar_prefetch=0,
                grid=(B,),
                in_specs=[
                    pl.BlockSpec((1, C, HW), lambda b: (b, 0, 0)),  # x slab
                    pl.BlockSpec((C, C), lambda b: (0, 0)),          # fused W
                    pl.BlockSpec((1, C), lambda b: (0, 0)),          # fused b
                ],
                out_specs=pl.BlockSpec((1, C, HW), lambda b: (b, 0, 0)),
            ),
            compiler_params=pltpu.CompilerParams(
                dimension_semantics=("parallel",),
                vmem_limit_bytes=32 * 1024 * 1024),
        )(x, w_fused, b_fused)
        return out.reshape(B, C, H, W)

    # --- Fallback: two-phase tiled design for large C * HW ---
    thw = _choose_hw_tile(HW, C, bytes_per_elem=itemsize)
    n_hw = HW // thw

    # Phase 1: pooled mean -> fused linear -> sigmoid gate (B, C, 1)
    # TODO(synk): for very large C, also tile the channel axis in this phase
    # (would need the gate finalize split out of the reduction kernel).
    gate = pl.pallas_call(
        functools.partial(_pool_gate_kernel, 1.0 / float(HW)),
        out_shape=jax.ShapeDtypeStruct((B, C, 1), jnp.float32),
        grid_spec=pltpu.PrefetchScalarGridSpec(
            num_scalar_prefetch=0,
            grid=(n_hw,),
            in_specs=[
                pl.BlockSpec((B, C, thw), lambda k: (0, 0, k)),   # x tile
                pl.BlockSpec((C, C), lambda k: (0, 0)),           # fused W
                pl.BlockSpec((1, C), lambda k: (0, 0)),           # fused b
            ],
            out_specs=pl.BlockSpec((B, C, 1), lambda k: (0, 0, 0)),
            scratch_shapes=[pltpu.VMEM((B, C), jnp.float32)],
        ),
        compiler_params=pltpu.CompilerParams(
            dimension_semantics=("arbitrary",)),
    )(x, w_fused, b_fused)

    # Phase 2: gated scale, gridded over (B, HW tiles), lane-dense out
    out = pl.pallas_call(
        _scale_kernel,
        out_shape=jax.ShapeDtypeStruct((B, C, HW), x_nchw.dtype),
        grid_spec=pltpu.PrefetchScalarGridSpec(
            num_scalar_prefetch=0,
            grid=(B, n_hw),
            in_specs=[
                pl.BlockSpec((1, C, thw), lambda b, k: (b, 0, k)),  # x tile
                pl.BlockSpec((1, C, 1), lambda b, k: (b, 0, 0)),    # gate
            ],
            out_specs=pl.BlockSpec((1, C, thw), lambda b, k: (b, 0, k)),
        ),
        compiler_params=pltpu.CompilerParams(
            dimension_semantics=("parallel", "parallel")),
    )(x, gate)

    return out.reshape(B, C, H, W)


def make_params(in_channels, reduction=16, seed=0):
    hidden = in_channels // reduction
    k1, k2, k3, k4 = jax.random.split(jax.random.PRNGKey(seed), 4)
    w1 = jax.random.normal(k1, (in_channels, hidden), jnp.float32) * 0.1
    b1 = jax.random.normal(k2, (1, hidden), jnp.float32) * 0.1
    w2 = jax.random.normal(k3, (hidden, in_channels), jnp.float32) * 0.1
    b2 = jax.random.normal(k4, (1, in_channels), jnp.float32) * 0.1
    return w1, b1, w2, b2


def se_block_ref(x, w1, b1, w2, b2):
    """Pure-JAX reference mirroring the PyTorch forward (no ReLU between fcs)."""
    pooled = jnp.mean(x, axis=(2, 3))                    # (B, C)
    e = jax.nn.sigmoid((pooled @ w1 + b1) @ w2 + b2)     # (B, C)
    return x * e[:, :, None, None]


if __name__ == "__main__":
    B, C, H, W = 2, 32, 16, 16          # reduction=16 -> hidden=2
    x = jax.random.normal(jax.random.PRNGKey(0), (B, C, H, W), jnp.float32)
    w1, b1, w2, b2 = make_params(C, reduction=16, seed=0)

    ref = se_block_ref(x, w1, b1, w2, b2)

    # Fast fused single-pass path (taken at this shape).
    out_fused = jax.block_until_ready(se_block(x, w1, b1, w2, b2))
    assert out_fused.shape == (B, C, H, W)
    assert jnp.allclose(out_fused, ref, atol=1e-5, rtol=1e-5), "fused path mismatch"

    # Two-phase fallback path (exercised explicitly for coverage).
    out_2p = jax.block_until_ready(
        se_block(x, w1, b1, w2, b2, force_two_phase=True))
    assert jnp.allclose(out_2p, ref, atol=1e-5, rtol=1e-5), "two-phase path mismatch"

    print("KERNEL_OK")
</pallas_src>

<mosaic_0001>
module attributes {stable_mosaic.version = 11 : i64} {
  func.func @_se_fused_kernel(%arg0: i32, %arg1: memref<1x32x256xf32, #tpu.memory_space<vmem>>, %arg2: memref<32x32xf32, #tpu.memory_space<vmem>>, %arg3: memref<1x32xf32, #tpu.memory_space<vmem>>, %arg4: memref<1x32x256xf32, #tpu.memory_space<vmem>>) attributes {dimension_semantics = [#tpu.dimension_semantics<parallel>], iteration_bounds = array<i64: 2>, scalar_prefetch = 0 : i64, scratch_operands = 0 : i64, tpu.core_type = #tpu.core_type<tc>, window_params = [{transform_indices = @transform_0, window_bounds = array<i64: 1, 32, 256>}, {pipeline_mode = #tpu.pipeline_mode<synchronous>, transform_indices = @transform_1, window_bounds = array<i64: 32, 32>}, {pipeline_mode = #tpu.pipeline_mode<synchronous>, transform_indices = @transform_2, window_bounds = array<i64: 1, 32>}, {transform_indices = @transform_3, window_bounds = array<i64: 1, 32, 256>}]} {
    %c0 = arith.constant 0 : index
    %c0_0 = arith.constant 0 : index
    %c0_1 = arith.constant 0 : index
    %0 = vector.load %arg1[%c0, %c0_0, %c0_1] : memref<1x32x256xf32, #tpu.memory_space<vmem>>, vector<1x32x256xf32>
    %cst = arith.constant dense<0.000000e+00> : vector<1x32xf32>
    %1 = vector.multi_reduction <add>, %0, %cst [2] : vector<1x32x256xf32> to vector<1x32xf32>
    %cst_2 = arith.constant 3.906250e-03 : f32
    %2 = vector.broadcast %cst_2 : f32 to vector<1x32xf32>
    %3 = arith.mulf %1, %2 : vector<1x32xf32>
    %c0_3 = arith.constant 0 : index
    %c0_4 = arith.constant 0 : index
    %4 = vector.load %arg2[%c0_3, %c0_4] : memref<32x32xf32, #tpu.memory_space<vmem>>, vector<32x32xf32>
    %cst_5 = arith.constant dense<0.000000e+00> : vector<1x32xf32>
    %5 = tpu.matmul %3, %4, %cst_5 {dimension_numbers = #tpu.dot_dimension_numbers<[1], [0], [0], [1], [0, 0, 1, 1], [], []>} : vector<1x32xf32>, vector<32x32xf32>, vector<1x32xf32> -> vector<1x32xf32>
    %c0_6 = arith.constant 0 : index
    %c0_7 = arith.constant 0 : index
    %6 = vector.load %arg3[%c0_6, %c0_7] : memref<1x32xf32, #tpu.memory_space<vmem>>, vector<1x32xf32>
    %7 = arith.addf %5, %6 : vector<1x32xf32>
    %8 = arith.negf %7 : vector<1x32xf32>
    %9 = math.exp %8 : vector<1x32xf32>
    %cst_8 = arith.constant 1.000000e+00 : f32
    %10 = vector.broadcast %cst_8 : f32 to vector<1x32xf32>
    %11 = arith.addf %10, %9 : vector<1x32xf32>
    %12 = arith.divf %10, %11 : vector<1x32xf32>
    %c0_9 = arith.constant 0 : index
    %c0_10 = arith.constant 0 : index
    %c0_11 = arith.constant 0 : index
    %13 = vector.load %arg1[%c0_9, %c0_10, %c0_11] : memref<1x32x256xf32, #tpu.memory_space<vmem>>, vector<1x32x256xf32>
    %14 = vector.shape_cast %12 : vector<1x32xf32> to vector<1x32x1xf32>
    %15 = vector.broadcast %14 : vector<1x32x1xf32> to vector<1x32x256xf32>
    %16 = arith.mulf %13, %15 : vector<1x32x256xf32>
    %c0_12 = arith.constant 0 : index
    %c0_13 = arith.constant 0 : index
    %c0_14 = arith.constant 0 : index
    %17 = vector.load %arg4[%c0_12, %c0_13, %c0_14] : memref<1x32x256xf32, #tpu.memory_space<vmem>>, vector<1x32x256xf32>
    tpu.vector_store %arg4[%c0_12, %c0_13, %c0_14], %16 {strides = array<i32>} : memref<1x32x256xf32, #tpu.memory_space<vmem>>, vector<1x32x256xf32>,
    return
  }
  func.func @transform_0(%arg0: i32) -> (i32, i32, i32) {
    %c0_i32 = arith.constant 0 : i32
    %c0_i32_0 = arith.constant 0 : i32
    %c0_i32_1 = arith.constant 0 : i32
    return %arg0, %c0_i32, %c0_i32_0 : i32, i32, i32
  }
  func.func @transform_1(%arg0: i32) -> (i32, i32) {
    %c0_i32 = arith.constant 0 : i32
    %c0_i32_0 = arith.constant 0 : i32
    %c0_i32_1 = arith.constant 0 : i32
    return %c0_i32, %c0_i32_0 : i32, i32
  }
  func.func @transform_2(%arg0: i32) -> (i32, i32) {
    %c0_i32 = arith.constant 0 : i32
    %c0_i32_0 = arith.constant 0 : i32
    %c0_i32_1 = arith.constant 0 : i32
    return %c0_i32, %c0_i32_0 : i32, i32
  }
  func.func @transform_3(%arg0: i32) -> (i32, i32, i32) {
    %c0_i32 = arith.constant 0 : i32
    %c0_i32_0 = arith.constant 0 : i32
    %c0_i32_1 = arith.constant 0 : i32
    return %arg0, %c0_i32, %c0_i32_0 : i32, i32, i32
  }
}

</mosaic_0001>

<llo_original>
// kernel: tpu_custom_call.1
$region0: #{tpu_custom_call.1}
  #allocation0 [shape = 'u32[]', space=smem, size = 0x4, offset = 0x4, fixed_abs, tag = 'smem constant byte address 0x4 - core index']
  #allocation1 [shape = 'u32[144,128]{1,0:T(1,128)}', space=vmem, size = 0x12000, scoped, tag = 'internal scratch']
  %s0 = inlined_call_operand.hbm [shape: f32[2,32,256], index: 0, kind: input, shape index: {}]
  %s1 = inlined_call_operand.hbm [shape: f32[32,32], index: 1, kind: input, shape index: {}]
  %s2 = inlined_call_operand.vmem [shape: f32[1,32], index: 2, kind: input, shape index: {}]
  %s3 = inlined_call_operand.hbm [shape: f32[2,32,256], index: 3, kind: output, shape index: {}]
  %s4 = sld [smem:[#allocation0]]
  $region53: #{tpu_custom_call.1} parent=0
    _
  %s6 = ssub.s32 1, %s4
  %s7 = scalar_select 0, %s6, %s4
  $region1: #{tpu_custom_call.1} parent=0
    #allocation2 [shape = 'u8[65536]{0}', space=vmem, size = 0x10000, scoped, tag = 'input window, operand 0']
    #allocation3 [shape = 's32[2]{0}', space=sflag, size = 0x8, scoped, tag = 'scoped memory for tpu_custom_call.1']
    #allocation4 [shape = 's32[2]{0}', space=sflag, size = 0x8, scoped, tag = 'scoped memory for tpu_custom_call.1']
    #allocation5 [shape = 'u8[16384]{0}', space=vmem, size = 0x4000, scoped, tag = 'input window, operand 1, single buffered']
    #allocation6 [shape = 's32[1]{0}', space=sflag, size = 0x4, scoped, tag = 'scoped memory for tpu_custom_call.1']
    #allocation7 [shape = 'u8[65536]{0}', space=vmem, size = 0x10000, scoped, tag = 'output window, operand 0']
    %8 = vsyncpa [#allocation3], 0
    %s9 = scalar_lea.sflag [#allocation3], 1
    %10 = vsyncpa %s9, 0
    %11 = vsyncpa [#allocation6], 0
    %12 = vsyncpa [#allocation4], 0
    %s13 = scalar_lea.sflag [#allocation4], 1
    %14 = vsyncpa %s13, 0
    loop: start=0, step=1, limit=4
    $region2: #{tpu_custom_call.1} parent=1 // loop_pre_header
      _
    $region3: #{tpu_custom_call.1} parent=1 // loop_header
      %s16 = sphi 0, %s20
      %p17 = scmp.ge.s32.totalorder %s16, 4
      %s26 = sphi 0, %s28
      %s29 = sphi 0, %s26
      %s30 = sphi 0, %s29
      %s46 = sphi 0, %s30
      %s50 = sphi 0, %s50
      %s52 = sphi 0, %s50
      %s53 = sphi 0, %s52
      %s67 = sphi 0, %s53
      %s71 = sphi 0, %s71
      %s73 = sphi 0, %s71
      %s74 = sphi 0, %s73
      %s88 = sphi 0, %s74
      %s94 = sphi 0, %s96
      %s97 = sphi 0, %s94
      %s98 = sphi 0, %s97
      %s114 = sphi 0, %s98
    $region4: #{tpu_custom_call.1} parent=1 // loop_header_branch
      %19 = sbr.rel (%p17) target = $region8
    $region5: #{tpu_custom_call.1} parent=1 // loop_body
      %s21 = ssub.s32 %s16, 1
      %s22 = ssub.s32 %s16, 2
      %s23 = sadd.s32 %s16, 1
      %s24 = ssub.s32 %s16, %s23
      %p25 = scmp.eq.s32.totalorder %s24, 0
      %s27 = sadd.s32 %s26, 1
      %s28 = scalar_select %p25, %s26, %s27
      %p31 = pneg %p25
      %p32 = scmp.eq.s32.totalorder %s16, 1
      %p33 = por %p31, %p32
      %p34 = scmp.ne.s32.totalorder %s26, %s29
      %p35 = scmp.eq.s32.totalorder %s16, 0
      %p36 = por %p34, %p35
      %p37 = scmp.ne.s32.totalorder %s26, %s29
      %p38 = scmp.eq.s32.totalorder %s21, 1
      %p39 = por %p37, %p38
      %p40 = scmp.ne.s32.totalorder %s29, %s30
      %p41 = scmp.eq.s32.totalorder %s21, 0
      %p42 = por %p40, %p41
      %p43 = scmp.ne.s32.totalorder %s29, %s30
      %p44 = scmp.eq.s32.totalorder %s22, 1
      %p45 = por %p43, %p44
      %p47 = scmp.ne.s32.totalorder %s30, %s46
      %p48 = scmp.eq.s32.totalorder %s22, 0
      %p49 = por %p47, %p48
      %s51 = sadd.s32 %s50, 1
      %p54 = scmp.eq.s32.totalorder %s16, 1
      %p55 = scmp.ne.s32.totalorder %s50, %s52
      %p56 = scmp.eq.s32.totalorder %s16, 0
      %p57 = por %p55, %p56
      %p58 = scmp.ne.s32.totalorder %s50, %s52
      %p59 = scmp.eq.s32.totalorder %s21, 1
      %p60 = por %p58, %p59
      %p61 = scmp.ne.s32.totalorder %s52, %s53
      %p62 = scmp.eq.s32.totalorder %s21, 0
      %p63 = por %p61, %p62
      %p64 = scmp.ne.s32.totalorder %s52, %s53
      %p65 = scmp.eq.s32.totalorder %s22, 1
      %p66 = por %p64, %p65
      %p68 = scmp.ne.s32.totalorder %s53, %s67
      %p69 = scmp.eq.s32.totalorder %s22, 0
      %p70 = por %p68, %p69
      %s72 = sadd.s32 %s71, 1
      %p75 = scmp.eq.s32.totalorder %s16, 1
      %p76 = scmp.ne.s32.totalorder %s71, %s73
      %p77 = scmp.eq.s32.totalorder %s16, 0
      %p78 = por %p76, %p77
      %p79 = scmp.ne.s32.totalorder %s71, %s73
      %p80 = scmp.eq.s32.totalorder %s21, 1
      %p81 = por %p79, %p80
      %p82 = scmp.ne.s32.totalorder %s73, %s74
      %p83 = scmp.eq.s32.totalorder %s21, 0
      %p84 = por %p82, %p83
      %p85 = scmp.ne.s32.totalorder %s73, %s74
      %p86 = scmp.eq.s32.totalorder %s22, 1
      %p87 = por %p85, %p86
      %p89 = scmp.ne.s32.totalorder %s74, %s88
      %p90 = scmp.eq.s32.totalorder %s22, 0
      %p91 = por %p89, %p90
      %s92 = ssub.s32 %s16, %s23
      %p93 = scmp.eq.s32.totalorder %s92, 0
      %s95 = sadd.s32 %s94, 1
      %s96 = scalar_select %p93, %s94, %s95
      %p99 = pneg %p93
      %p100 = scmp.eq.s32.totalorder %s16, 1
      %p101 = por %p99, %p100
      %p102 = scmp.ne.s32.totalorder %s94, %s97
      %p103 = scmp.eq.s32.totalorder %s16, 0
      %p104 = por %p102, %p103
      %p105 = scmp.ne.s32.totalorder %s94, %s97
      %p106 = scmp.eq.s32.totalorder %s21, 1
      %p107 = por %p105, %p106
      %p108 = scmp.ne.s32.totalorder %s97, %s98
      %p109 = scmp.eq.s32.totalorder %s21, 0
      %p110 = por %p108, %p109
      %p111 = scmp.ne.s32.totalorder %s97, %s98
      %p112 = scmp.eq.s32.totalorder %s22, 1
      %p113 = por %p111, %p112
      %p115 = scmp.ne.s32.totalorder %s98, %s114
      %p116 = scmp.eq.s32.totalorder %s22, 0
      %p117 = por %p115, %p116
      %p118 = scmp.le.s32.totalorder 1, %s16
      %p119 = scmp.lt.s32.totalorder %s16, 3
      %p120 = pnand %p118, %p119
      %p121 = pneg %p120
      // Predicated region
      $region9: #{tpu_custom_call.1} parent=5 // pred_check
        _
      $region10: #{tpu_custom_call.1} parent=5 // pred_check_branch
        %123 = sbr.rel (%p120) target = $region12
      $region11: #{tpu_custom_call.1} parent=5 // pred_region
        %s124 = ssub.s32 %s16, 1
        // Predicated region
        $region13: #{tpu_custom_call.1} parent=11 // pred_check
          %p125 = pneg %p63
        $region14: #{tpu_custom_call.1} parent=11 // pred_check_branch
          %127 = sbr.rel (%p125) target = $region16
        $region15: #{tpu_custom_call.1} parent=11 // pred_region
          %s129 = ssub.s32 512, 512
          %130 = vsyncadd [#allocation6], %s129
          %s131 = sshll.u32 [#allocation5], 4
          %s132 = int_to_ptr.vmem [resolvable:$true] %s131
          %137 = dma.hbm_to_vmem [thread:$0]  %s1, 512, %s132, [#allocation6], 128, 128, 8
        $region16: #{tpu_custom_call.1} parent=11 // pred_fallthru
          _
        // Predicated region
        $region17: #{tpu_custom_call.1} parent=11 // pred_check
          %p138 = pneg %p84
        $region18: #{tpu_custom_call.1} parent=11 // pred_check_branch
          %140 = sbr.rel (%p138) target = $region20
        $region19: #{tpu_custom_call.1} parent=11 // pred_region
          _
        $region20: #{tpu_custom_call.1} parent=11 // pred_fallthru
          _
      $region12: #{tpu_custom_call.1} parent=5 // pred_fallthru
        _
      %p141 = scmp.lt.s32.totalorder %s16, 2
      // Predicated region
      $region21: #{tpu_custom_call.1} parent=5 // pred_check
        %p142 = pneg %p141
      $region22: #{tpu_custom_call.1} parent=5 // pred_check_branch
        %144 = sbr.rel (%p142) target = $region24
      $region23: #{tpu_custom_call.1} parent=5 // pred_region
        // Predicated region
        $region25: #{tpu_custom_call.1} parent=23 // pred_check
          %p145 = pneg %p36
        $region26: #{tpu_custom_call.1} parent=23 // pred_check_branch
          %147 = sbr.rel (%p145) target = $region28
        $region27: #{tpu_custom_call.1} parent=23 // pred_region
          %s148 = sand.u32 %s26, 1
          %s149 = scalar_lea.sflag [#allocation3], %s148
          %s150 = sand.u32 %s26, 1
          %s151 = smul.addr %s150, 64
          %s152 = scalar_lea.vmem [#allocation2], %s151
          %s154 = ssub.s32 1024, 1024
          %155 = vsyncadd %s149, %s154
          %s156 = smul.addr %s16, 8
          %s157 = smul.addr %s156, 128
          %s158 = scalar_lea.hbm %s0, %s157
          %s159 = sshll.u32 %s152, 4
          %s160 = int_to_ptr.vmem [resolvable:$true] %s159
          %165 = dma.hbm_to_vmem [thread:$0]  %s158, 1024, %s160, %s149, 256, 256, 16
        $region28: #{tpu_custom_call.1} parent=23 // pred_fallthru
          _
      $region24: #{tpu_custom_call.1} parent=5 // pred_fallthru
        _
      %p166 = scmp.le.s32.totalorder 1, %s16
      %p167 = scmp.lt.s32.totalorder %s16, 3
      %p168 = pnand %p166, %p167
      %p169 = pneg %p168
      // Predicated region
      $region29: #{tpu_custom_call.1} parent=5 // pred_check
        _
      $region30: #{tpu_custom_call.1} parent=5 // pred_check_branch
        %171 = sbr.rel (%p168) target = $region32
      $region31: #{tpu_custom_call.1} parent=5 // pred_region
        %s172 = ssub.s32 %s16, 1
        %s173 = sand.u32 %s29, 1
        %s174 = scalar_lea.sflag [#allocation3], %s173
        %s175 = sand.u32 %s29, 1
        %s176 = smul.addr %s175, 64
        %s177 = scalar_lea.vmem [#allocation2], %s176
        // Predicated region
        $region33: #{tpu_custom_call.1} parent=31 // pred_check
          %p178 = pneg %p42
        $region34: #{tpu_custom_call.1} parent=31 // pred_check_branch
          %180 = sbr.rel (%p178) target = $region36
        $region35: #{tpu_custom_call.1} parent=31 // pred_region
          %181 = dma.done %s174, 1024
        $region36: #{tpu_custom_call.1} parent=31 // pred_fallthru
          _
        // Predicated region
        $region37: #{tpu_custom_call.1} parent=31 // pred_check
          %p182 = pneg %p63
        $region38: #{tpu_custom_call.1} parent=31 // pred_check_branch
          %184 = sbr.rel (%p182) target = $region40
        $region39: #{tpu_custom_call.1} parent=31 // pred_region
          %185 = dma.done [#allocation6], 512
        $region40: #{tpu_custom_call.1} parent=31 // pred_fallthru
          _
        %s186 = sand.u32 %s29, 1
        %s187 = scalar_lea.sflag [#allocation3], %s186
        %s188 = sand.u32 %s29, 1
        %s189 = smul.addr %s188, 64
        %s190 = scalar_lea.vmem [#allocation2], %s189
        %p191 = pneg %p42
        %p192 = pneg %p39
        %p193 = pneg %p63
        %p194 = pneg %p60
        %p195 = pneg %p84
        %p196 = pneg %p81
        %p197 = pneg %p110
        %p198 = pneg %p107
        %s199 = sand.u32 %s97, 1
        %s200 = scalar_lea.sflag [#allocation4], %s199
        %s201 = sand.u32 %s97, 1
        %s202 = smul.addr %s201, 64
        %s203 = scalar_lea.vmem [#allocation7], %s202
        %v204 = vld [vmem:[%s177] sm:$0xff]
        %v205 = vld [vmem:[%s177 + $0x8] sm:$0xff]
        %v206 = vld [vmem:[%s177 + $0x10] sm:$0xff]
        %v207 = vld [vmem:[%s177 + $0x18] sm:$0xff]
        %v208 = vld [vmem:[%s177 + $0x20] sm:$0xff]
        %v209 = vld [vmem:[%s177 + $0x28] sm:$0xff]
        %v210 = vld [vmem:[%s177 + $0x30] sm:$0xff]
        %v211 = vld [vmem:[%s177 + $0x38] sm:$0xff]
        %v212 = vadd.f32 %v204, %v205
        %213 = vadd.xlane.f32.xlu0 %v212
        %v214 = vpop.xlane.xlu0 %213
        %v215 = vadd.f32 %v206, %v207
        %216 = vadd.xlane.f32.xlu0 %v215
        %v217 = vpop.xlane.xlu0 %216
        %v218 = vadd.f32 %v208, %v209
        %219 = vadd.xlane.f32.xlu0 %v218
        %v220 = vpop.xlane.xlu0 %219
        %v221 = vadd.f32 %v210, %v211
        %222 = vadd.xlane.f32.xlu0 %v221
        %v223 = vpop.xlane.xlu0 %222
        %v224 = vmul.f32 %v214, 0.00390625
        %v225 = vmul.f32 %v217, 0.00390625
        %v226 = vmul.f32 %v220, 0.00390625
        %v227 = vmul.f32 %v223, 0.00390625
        %v228 = vld [vmem:[#allocation5] sm:$0xff]
        %v229 = vld [vmem:[#allocation5 + $0x8] sm:$0xff]
        %v230 = vld [vmem:[#allocation5 + $0x10] sm:$0xff]
        %v231 = vld [vmem:[#allocation5 + $0x18] sm:$0xff]
        %v232 = vld [vmem:[%s2] sm:$0x1]
        %v237 = vlaneseq
        %v238 = vand.u32 %v237, 127
        %v239 = vlaneseq
        %v240 = vshrl.u32 %v239, 7
        %v241 = vsub.s32 %v238, %v240
        %v242 = vrot.slane %v224, %v241
        %v243 = vadd.s32 %v238, 4294967288
        %v244 = vlaneseq
        %v245 = vshrl.u32 %v244, 7
        %v246 = vsub.s32 %v243, %v245
        %v247 = vrot.slane %v225, %v246
        %vm248 = vcmask 130112
        %v249 = vsel %vm248, %v247, %v242
        %v250 = vadd.s32 %v238, 4294967280
        %v251 = vlaneseq
        %v252 = vshrl.u32 %v251, 7
        %v253 = vsub.s32 %v250, %v252
        %v254 = vrot.slane %v226, %v253
        %vm255 = vcmask 195712
        %v256 = vsel %vm255, %v254, %v249
        %v257 = vadd.s32 %v238, 4294967272
        %v258 = vlaneseq
        %v259 = vshrl.u32 %v258, 7
        %v260 = vsub.s32 %v257, %v259
        %v261 = vrot.slane %v227, %v260
        %vm262 = vcmask 261312
        %v263 = vsel %vm262, %v261, %v256
        %vm264 = vcmask 261120
        %v265 = vsel %vm264, %v263, 0
        %267 = vmatprep.subr.mxu0 0.0
        %268 = vmatpush1.msra.mxu0 %v228
        %269 = vmatprep.subr.mxu0 0.0
        %270 = vmatpush1.msra.mxu0 %v229
        %271 = vmatprep.subr.mxu0 0.0
        %272 = vmatpush1.msra.mxu0 %v230
        %273 = vmatprep.subr.mxu0 0.0
        %274 = vmatpush1.msra.mxu0 %v231
        %275 = vmatprep.subr.mxu0 0.0
        %276 = vmatpush1.msra.mxu0 0.0
        %277 = vmatprep.subr.mxu0 0.0
        %278 = vmatpush1.msra.mxu0 0.0
        %279 = vmatprep.subr.mxu0 0.0
        %280 = vmatpush1.msra.mxu0 0.0
        %281 = vmatprep.subr.mxu0 0.0
        %282 = vmatpush1.msra.mxu0 0.0
        %283 = vmatprep.subr.mxu0 0.0
        %284 = vmatpush1.msra.mxu0 0.0
        %285 = vmatprep.subr.mxu0 0.0
        %286 = vmatpush1.msra.mxu0 0.0
        %287 = vmatprep.subr.mxu0 0.0
        %288 = vmatpush1.msra.mxu0 0.0
        %289 = vmatprep.subr.mxu0 0.0
        %290 = vmatpush1.msra.mxu0 0.0
        %291 = vmatprep.subr.mxu0 0.0
        %292 = vmatpush1.msra.mxu0 0.0
        %293 = vmatprep.subr.mxu0 0.0
        %294 = vmatpush1.msra.mxu0 0.0
        %295 = vmatprep.subr.mxu0 0.0
        %296 = vmatpush1.msra.mxu0 0.0
        %297 = vmatprep.subr.mxu0 0.0
        %298 = vmatpush1.msra.mxu0 0.0
        %299 = vmatprep.subr.mxu0 0.0
        %300 = vmatpush1.msra.mxu0 0.0
        %301 = vmatprep.subr.mxu0 0.0
        %302 = vmatpush1.msra.mxu0 0.0
        %303 = vmatprep.subr.mxu0 0.0
        %304 = vmatpush1.msra.mxu0 0.0
        %305 = vmatprep.subr.mxu0 0.0
        %306 = vmatpush1.msra.mxu0 0.0
        %307 = vmatprep.subr.mxu0 0.0
        %308 = vmatpush1.msra.mxu0 0.0
        %309 = vmatprep.subr.mxu0 0.0
        %310 = vmatpush1.msra.mxu0 0.0
        %311 = vmatprep.subr.mxu0 0.0
        %312 = vmatpush1.msra.mxu0 0.0
        %313 = vmatprep.subr.mxu0 0.0
        %314 = vmatpush1.msra.mxu0 0.0
        %315 = vmatprep.subr.mxu0 0.0
        %316 = vmatpush1.msra.mxu0 0.0
        %317 = vmatprep.subr.mxu0 0.0
        %318 = vmatpush1.msra.mxu0 0.0
        %319 = vmatprep.subr.mxu0 0.0
        %320 = vmatpush1.msra.mxu0 0.0
        %321 = vmatprep.subr.mxu0 0.0
        %322 = vmatpush1.msra.mxu0 0.0
        %323 = vmatprep.subr.mxu0 0.0
        %324 = vmatpush1.msra.mxu0 0.0
        %325 = vmatprep.subr.mxu0 0.0
        %326 = vmatpush1.msra.mxu0 0.0
        %327 = vmatprep.subr.mxu0 0.0
        %328 = vmatpush1.msra.mxu0 0.0
        %329 = vmatprep.subr.mxu0 0.0
        %330 = vmatpush1.msra.mxu0 0.0
        %331 = vmatprep.mubr.f32.mxu0 0.0
        %332 = vmatmul.mubr.f32.gmra.mrb[0].mxu0 %v265
        %v333 = vpop.f32.mrb[0].mxu0
        %v334 = vadd.f32 %v232, %v333
        %v335 = vpop.f32.mrb[0].mxu0
        %336 = vdwg.mxu0
        %v337 = vxor.u32 %v334, 2147483648
        %v338 = vmul.f32 %v337, 1.442695
        %v339 = vpow.pop %v338
        %v340 = vadd.f32 %v339, 1.0
        %v341 = vrcp.pop %v340
        %v342 = vmul.f32 1.0, %v341
        %v343 = vlaneseq
        %v344 = vshrl.u32 %v343, 7
        %v345 = vsub.s32 0, %v344
        %v346 = vrot.slane %v342, %v345
        %348 = vbcast.lane.b32.xlu0 %v346, 256
        %v349 = vpop.permute.xlu0 %348
        %s351 = sor.u32 256, 8
        %352 = vbcast.lane.b32.xlu0 %v346, %s351
        %v353 = vpop.permute.xlu0 %352
        %s355 = sor.u32 256, 16
        %356 = vbcast.lane.b32.xlu0 %v346, %s355
        %v357 = vpop.permute.xlu0 %356
        %s359 = sor.u32 256, 24
        %360 = vbcast.lane.b32.xlu0 %v346, %s359
        %v361 = vpop.permute.xlu0 %360
        %v362 = vmul.f32 %v204, %v349
        %v363 = vmul.f32 %v205, %v349
        %v364 = vmul.f32 %v206, %v353
        %v365 = vmul.f32 %v207, %v353
        %v366 = vmul.f32 %v208, %v357
        %v367 = vmul.f32 %v209, %v357
        %v368 = vmul.f32 %v210, %v361
        %v369 = vmul.f32 %v211, %v361
        %370 = vst [vmem:[%s203] sm:$0xff] %v362
        %371 = vst [vmem:[%s203 + $0x8] sm:$0xff] %v363
        %372 = vst [vmem:[%s203 + $0x10] sm:$0xff] %v364
        %373 = vst [vmem:[%s203 + $0x18] sm:$0xff] %v365
        %374 = vst [vmem:[%s203 + $0x20] sm:$0xff] %v366
        %375 = vst [vmem:[%s203 + $0x28] sm:$0xff] %v367
        %376 = vst [vmem:[%s203 + $0x30] sm:$0xff] %v368
        %377 = vst [vmem:[%s203 + $0x38] sm:$0xff] %v369
        %s378 = sand.u32 %s97, 1
        %s379 = scalar_lea.sflag [#allocation4], %s378
        %s380 = sand.u32 %s97, 1
        %s381 = smul.addr %s380, 64
        %s382 = scalar_lea.vmem [#allocation7], %s381
        // Predicated region
        $region41: #{tpu_custom_call.1} parent=31 // pred_check
          %p383 = pneg %p107
        $region42: #{tpu_custom_call.1} parent=31 // pred_check_branch
          %385 = sbr.rel (%p383) target = $region44
        $region43: #{tpu_custom_call.1} parent=31 // pred_region
          %s387 = ssub.s32 1024, 1024
          %388 = vsyncadd %s379, %s387
          %s389 = smul.addr %s21, 8
          %s390 = smul.addr %s389, 128
          %s391 = scalar_lea.hbm %s3, %s390
          %s392 = sshll.u32 %s382, 4
          %s393 = int_to_ptr.vmem [resolvable:$true] %s392
          %398 = dma.vmem_to_hbm [thread:$0]  %s393, 1024, %s391, %s379, 256, 256, 16
        $region44: #{tpu_custom_call.1} parent=31 // pred_fallthru
          _
      $region32: #{tpu_custom_call.1} parent=5 // pred_fallthru
        _
      %p399 = scmp.le.s32.totalorder 2, %s16
      // Predicated region
      $region45: #{tpu_custom_call.1} parent=5 // pred_check
        %p400 = pneg %p399
      $region46: #{tpu_custom_call.1} parent=5 // pred_check_branch
        %402 = sbr.rel (%p400) target = $region48
      $region47: #{tpu_custom_call.1} parent=5 // pred_region
        %s403 = ssub.s32 %s16, 2
        // Predicated region
        $region49: #{tpu_custom_call.1} parent=47 // pred_check
          %p404 = pneg %p113
        $region50: #{tpu_custom_call.1} parent=47 // pred_check_branch
          %406 = sbr.rel (%p404) target = $region52
        $region51: #{tpu_custom_call.1} parent=47 // pred_region
          %s407 = sand.u32 %s98, 1
          %s408 = scalar_lea.sflag [#allocation4], %s407
          %s409 = sand.u32 %s98, 1
          %s410 = smul.addr %s409, 64
          %s411 = scalar_lea.vmem [#allocation7], %s410
          %412 = dma.done %s408, 1024
        $region52: #{tpu_custom_call.1} parent=47 // pred_fallthru
          _
      $region48: #{tpu_custom_call.1} parent=5 // pred_fallthru
        _
    $region6: #{tpu_custom_call.1} parent=1 // loop_footer
      %s20 = sadd.s32 1, %s16
    $region7: #{tpu_custom_call.1} parent=1 // loop_footer_branch
      %15 = sbr.rel target = $region3
    $region8: #{tpu_custom_call.1} parent=1 // loop_exit
      _
    %413 = vsyncpa [#allocation3], 1
    %s414 = scalar_lea.sflag [#allocation3], 1
    %415 = vsyncpa %s414, 1
    %416 = vsyncpa [#allocation6], 1
    %417 = vsyncpa [#allocation4], 1
    %s418 = scalar_lea.sflag [#allocation4], 1
    %419 = vsyncpa %s418, 1

</llo_original>
